<compile_context>
chip_gen: v6e
topology: v6e:2x2x1
jax: 0.10.0
libtpu: 0.0.40
codegen_flags: <defaults>
</compile_context>

<pallas_src>
import jax
import jax.numpy as jnp
from jax.experimental import pallas as pl
from jax.experimental.pallas import tpu as pltpu

_VMEM_LIMIT_BYTES = 48 * 1024 * 1024  # above v5e/v6e defaults, below v7x 64 MiB physical


def _layer_norm(x, w, b, eps=1e-5):
    mu = jnp.mean(x, axis=-1, keepdims=True)
    xc = x - mu
    var = jnp.mean(xc * xc, axis=-1, keepdims=True)
    return xc * jax.lax.rsqrt(var + eps) * w + b


def _gelu(x):
    # exact (erf-based) GELU, matching torch.nn.functional.gelu default
    return 0.5 * x * (1.0 + jax.lax.erf(x * 0.7071067811865476))


# ----------------------- kernel 1: LN1 + fused Q/K/V projection -----------------------
def qkv_proj_kernel(x_ref, ln1_w_ref, ln1_b_ref, wq_ref, wk_ref, wv_ref,
                    q_ref, k_ref, v_ref):
    x = x_ref[0].astype(jnp.float32)                                  # (TQ, H)
    xn = _layer_norm(x, ln1_w_ref[...], ln1_b_ref[...]).astype(jnp.bfloat16)
    q_ref[0] = jnp.dot(xn, wq_ref[...],
                       preferred_element_type=jnp.float32).astype(q_ref.dtype)
    k_ref[0] = jnp.dot(xn, wk_ref[...],
                       preferred_element_type=jnp.float32).astype(k_ref.dtype)
    v_ref[0] = jnp.dot(xn, wv_ref[...],
                       preferred_element_type=jnp.float32).astype(v_ref.dtype)


# ------------- kernel 2: attention + out_proj + residual + LN2 + MLP + residual -------
def attn_mlp_kernel(q_ref, k_ref, v_ref, x_ref, wout_ref,
                    ln2_w_ref, ln2_b_ref, w1_ref, b1_ref, w2_ref, b2_ref,
                    out_ref):
    q = q_ref[0]                                                      # (nh, TQ, d) bf16
    k = k_ref[0]                                                      # (nh, N,  d) bf16
    v = v_ref[0]                                                      # (nh, N,  d) bf16

    # scores (nh, TQ, N); the 1/sqrt(head_size) scale is folded into Wq at init time.
    s = jnp.einsum('hqd,hkd->hqk', q, k, preferred_element_type=jnp.float32)
    s = s - jnp.max(s, axis=-1, keepdims=True)
    p = jnp.exp(s)
    p = p * pl.reciprocal(jnp.sum(p, axis=-1, keepdims=True), approx=True)
    ctx = jnp.einsum('hqk,hkd->hqd', p.astype(jnp.bfloat16), v,
                     preferred_element_type=jnp.float32)              # (nh, TQ, d)

    # per-head out-projection summed over heads == concat(heads) @ Wout  (no concat op)
    attn = jnp.einsum('hqd,hdo->hqo', ctx.astype(jnp.bfloat16), wout_ref[...],
                      preferred_element_type=jnp.float32)             # (nh, TQ, H)
    x1 = jnp.sum(attn, axis=0) + x_ref[0].astype(jnp.float32)         # residual 1

    xn = _layer_norm(x1, ln2_w_ref[...], ln2_b_ref[...]).astype(jnp.bfloat16)
    h1 = jnp.dot(xn, w1_ref[...], preferred_element_type=jnp.float32) + b1_ref[...]
    h1 = _gelu(h1).astype(jnp.bfloat16)
    h2 = jnp.dot(h1, w2_ref[...], preferred_element_type=jnp.float32) + b2_ref[...]
    h2 = _gelu(h2)   # the spec MLP applies GELU after proj2 as well (see model.py MLP)
    out_ref[0] = (h2 + x1).astype(out_ref.dtype)                      # residual 2


def _full_spec(shape):
    # Weights: constant index_map -> Pallas keeps the block resident (no re-DMA per
    # grid step). TODO(synk): request single-buffering (pipeline_mode=pl.Buffered(1))
    # to also halve their VMEM footprint on v7x once that path is universally available.
    return pl.BlockSpec(shape, lambda b, qi: (0,) * len(shape))


def encoder_layer(x, layer_params, n_heads, tq=256):
    B, N, H = x.shape
    head_size = H // n_heads
    (ln1_w, ln1_b, wq, wk, wv, wout3, ln2_w, ln2_b, w1, b1, w2, b2) = layer_params
    M = w1.shape[1]

    tq = min(tq, N)
    if N % tq != 0:
        tq = N            # fall back to a single row tile if N is not divisible
    nq = N // tq

    cparams = pltpu.CompilerParams(
        dimension_semantics=("parallel", "parallel"),
        vmem_limit_bytes=_VMEM_LIMIT_BYTES,
    )

    row_spec = pl.BlockSpec((1, tq, H), lambda b, qi: (b, qi, 0))

    # ---- kernel 1: LN1 + Q/K/V projections (lane-dense (TQ, H) outputs) ----
    q, k, v = pl.pallas_call(
        qkv_proj_kernel,
        out_shape=tuple(jax.ShapeDtypeStruct((B, N, H), jnp.bfloat16) for _ in range(3)),
        grid=(B, nq),
        in_specs=[row_spec,
                  _full_spec((1, H)), _full_spec((1, H)),
                  _full_spec((H, H)), _full_spec((H, H)), _full_spec((H, H))],
        out_specs=(row_spec, row_spec, row_spec),
        compiler_params=cparams,
    )(x, ln1_w, ln1_b, wq, wk, wv)

    # Head-split layout (B, nh, N, d): plain XLA layout plumbing outside the kernel.
    def to_heads(t):
        return t.reshape(B, N, n_heads, head_size).transpose(0, 2, 1, 3)
    qh, kh, vh = to_heads(q), to_heads(k), to_heads(v)

    q_spec = pl.BlockSpec((1, n_heads, tq, head_size), lambda b, qi: (b, 0, qi, 0))
    kv_spec = pl.BlockSpec((1, n_heads, N, head_size), lambda b, qi: (b, 0, 0, 0))

    # ---- kernel 2: attention + out_proj + residual + LN2 + MLP + residual ----
    out = pl.pallas_call(
        attn_mlp_kernel,
        out_shape=jax.ShapeDtypeStruct((B, N, H), jnp.float32),
        grid=(B, nq),
        in_specs=[q_spec, kv_spec, kv_spec, row_spec,
                  _full_spec((n_heads, head_size, H)),
                  _full_spec((1, H)), _full_spec((1, H)),
                  _full_spec((H, M)), _full_spec((1, M)),
                  _full_spec((M, H)), _full_spec((1, H))],
        out_specs=row_spec,
        compiler_params=cparams,
    )(qh, kh, vh, x, wout3, ln2_w, ln2_b, w1, b1, w2, b2)
    return out


def transformer_encoder(x, params, n_heads):
    # TODO(synk): prefetch layer l+1 weights while layer l computes (cross-pallas_call
    # DMA future) to hide the weight-HBM traffic at small batch.
    for layer_params in params:
        x = encoder_layer(x, layer_params, n_heads)
    return x


def init_params(key, n_layers, hidden_size, mlp_size, n_heads):
    """Weights stored pre-transposed as (in, out) so kernels compute y = x @ W (+ b).

    Matmul weights are bf16 (f32 MXU accumulation in-kernel); LN params / biases are f32.
    The attention scale 1/sqrt(head_size) is folded into Wq; Wout is stored as
    (n_heads, head_size, hidden) so the out-projection is a batched per-head matmul.
    qkv_proj / out_proj have no bias (bias=False in the spec MSA); MLP linears do.
    """
    head_size = hidden_size // n_heads
    scale = 1.0 / (head_size ** 0.5)
    std = 0.02
    params = []
    for _ in range(n_layers):
        key, *ks = jax.random.split(key, 9)
        ln1_w = jnp.ones((1, hidden_size), jnp.float32)
        ln1_b = jnp.zeros((1, hidden_size), jnp.float32)
        wq = (std * scale * jax.random.normal(ks[0], (hidden_size, hidden_size))
              ).astype(jnp.bfloat16)
        wk = (std * jax.random.normal(ks[1], (hidden_size, hidden_size))).astype(jnp.bfloat16)
        wv = (std * jax.random.normal(ks[2], (hidden_size, hidden_size))).astype(jnp.bfloat16)
        wout3 = (std * jax.random.normal(ks[3], (hidden_size, hidden_size))
                 ).astype(jnp.bfloat16).reshape(n_heads, head_size, hidden_size)
        ln2_w = jnp.ones((1, hidden_size), jnp.float32)
        ln2_b = jnp.zeros((1, hidden_size), jnp.float32)
        w1 = (std * jax.random.normal(ks[4], (hidden_size, mlp_size))).astype(jnp.bfloat16)
        b1 = std * jax.random.normal(ks[5], (1, mlp_size))
        w2 = (std * jax.random.normal(ks[6], (mlp_size, hidden_size))).astype(jnp.bfloat16)
        b2 = std * jax.random.normal(ks[7], (1, hidden_size))
        params.append((ln1_w, ln1_b, wq, wk, wv, wout3, ln2_w, ln2_b, w1, b1, w2, b2))
    return params


if __name__ == "__main__":
    # small config: n_layers=2, hidden=32, mlp=64, heads=4, batch=2, seq=8
    n_layers, hidden_size, mlp_size, n_heads = 2, 32, 64, 4
    B, N = 2, 8

    key = jax.random.PRNGKey(0)
    key_x, key_p = jax.random.split(key)
    x = jax.random.normal(key_x, (B, N, hidden_size), jnp.float32)
    params = init_params(key_p, n_layers, hidden_size, mlp_size, n_heads)

    out = transformer_encoder(x, params, n_heads)
    out = jax.block_until_ready(out)
    assert out.shape == (B, N, hidden_size)
    assert bool(jnp.all(jnp.isfinite(out)))
    print("KERNEL_OK")
</pallas_src>

<mosaic_0001>
module attributes {stable_mosaic.version = 11 : i64} {
  func.func @qkv_proj_kernel(%arg0: i32, %arg1: i32, %arg2: memref<1x8x32xf32, #tpu.memory_space<vmem>>, %arg3: memref<1x32xf32, #tpu.memory_space<vmem>>, %arg4: memref<1x32xf32, #tpu.memory_space<vmem>>, %arg5: memref<32x32xbf16, #tpu.memory_space<vmem>>, %arg6: memref<32x32xbf16, #tpu.memory_space<vmem>>, %arg7: memref<32x32xbf16, #tpu.memory_space<vmem>>, %arg8: memref<1x8x32xbf16, #tpu.memory_space<vmem>>, %arg9: memref<1x8x32xbf16, #tpu.memory_space<vmem>>, %arg10: memref<1x8x32xbf16, #tpu.memory_space<vmem>>) attributes {dimension_semantics = [#tpu.dimension_semantics<parallel>, #tpu.dimension_semantics<parallel>], iteration_bounds = array<i64: 2, 1>, scalar_prefetch = 0 : i64, scratch_operands = 0 : i64, tpu.core_type = #tpu.core_type<tc>, window_params = [{transform_indices = @transform_0, window_bounds = array<i64: 1, 8, 32>}, {pipeline_mode = #tpu.pipeline_mode<synchronous>, transform_indices = @transform_1, window_bounds = array<i64: 1, 32>}, {pipeline_mode = #tpu.pipeline_mode<synchronous>, transform_indices = @transform_2, window_bounds = array<i64: 1, 32>}, {pipeline_mode = #tpu.pipeline_mode<synchronous>, transform_indices = @transform_3, window_bounds = array<i64: 32, 32>}, {pipeline_mode = #tpu.pipeline_mode<synchronous>, transform_indices = @transform_4, window_bounds = array<i64: 32, 32>}, {pipeline_mode = #tpu.pipeline_mode<synchronous>, transform_indices = @transform_5, window_bounds = array<i64: 32, 32>}, {transform_indices = @transform_6, window_bounds = array<i64: 1, 8, 32>}, {transform_indices = @transform_7, window_bounds = array<i64: 1, 8, 32>}, {transform_indices = @transform_8, window_bounds = array<i64: 1, 8, 32>}]} {
    %c0 = arith.constant 0 : index
    %c0_0 = arith.constant 0 : index
    %c0_1 = arith.constant 0 : index
    %0 = vector.load %arg2[%c0, %c0_0, %c0_1] : memref<1x8x32xf32, #tpu.memory_space<vmem>>, vector<1x8x32xf32>
    %1 = vector.shape_cast %0 : vector<1x8x32xf32> to vector<8x32xf32>
    %c0_2 = arith.constant 0 : index
    %c0_3 = arith.constant 0 : index
    %2 = vector.load %arg3[%c0_2, %c0_3] : memref<1x32xf32, #tpu.memory_space<vmem>>, vector<1x32xf32>
    %c0_4 = arith.constant 0 : index
    %c0_5 = arith.constant 0 : index
    %3 = vector.load %arg4[%c0_4, %c0_5] : memref<1x32xf32, #tpu.memory_space<vmem>>, vector<1x32xf32>
    %cst = arith.constant dense<0.000000e+00> : vector<8xf32>
    %4 = vector.multi_reduction <add>, %1, %cst [1] : vector<8x32xf32> to vector<8xf32>
    %5 = vector.shape_cast %4 : vector<8xf32> to vector<8x1xf32>
    %cst_6 = arith.constant 3.200000e+01 : f32
    %6 = vector.broadcast %cst_6 : f32 to vector<8x1xf32>
    %7 = arith.divf %5, %6 : vector<8x1xf32>
    %8 = vector.broadcast %7 : vector<8x1xf32> to vector<8x32xf32>
    %9 = arith.subf %1, %8 : vector<8x32xf32>
    %10 = arith.mulf %9, %9 : vector<8x32xf32>
    %cst_7 = arith.constant dense<0.000000e+00> : vector<8xf32>
    %11 = vector.multi_reduction <add>, %10, %cst_7 [1] : vector<8x32xf32> to vector<8xf32>
    %12 = vector.shape_cast %11 : vector<8xf32> to vector<8x1xf32>
    %cst_8 = arith.constant 3.200000e+01 : f32
    %13 = vector.broadcast %cst_8 : f32 to vector<8x1xf32>
    %14 = arith.divf %12, %13 : vector<8x1xf32>
    %cst_9 = arith.constant 9.99999974E-6 : f32
    %15 = vector.broadcast %cst_9 : f32 to vector<8x1xf32>
    %16 = arith.addf %14, %15 : vector<8x1xf32>
    %17 = math.rsqrt %16 : vector<8x1xf32>
    %18 = vector.broadcast %17 : vector<8x1xf32> to vector<8x32xf32>
    %19 = arith.mulf %9, %18 : vector<8x32xf32>
    %20 = vector.broadcast %2 : vector<1x32xf32> to vector<8x32xf32>
    %21 = arith.mulf %19, %20 : vector<8x32xf32>
    %22 = vector.broadcast %3 : vector<1x32xf32> to vector<8x32xf32>
    %23 = arith.addf %21, %22 : vector<8x32xf32>
    %24 = arith.truncf %23 : vector<8x32xf32> to vector<8x32xbf16>
    %c0_10 = arith.constant 0 : index
    %c0_11 = arith.constant 0 : index
    %25 = vector.load %arg5[%c0_10, %c0_11] : memref<32x32xbf16, #tpu.memory_space<vmem>>, vector<32x32xbf16>
    %cst_12 = arith.constant dense<0.000000e+00> : vector<8x32xf32>
    %26 = tpu.matmul %24, %25, %cst_12 {dimension_numbers = #tpu.dot_dimension_numbers<[1], [0], [0], [1], [0, 0, 1, 1], [], []>} : vector<8x32xbf16>, vector<32x32xbf16>, vector<8x32xf32> -> vector<8x32xf32>
    %27 = arith.truncf %26 : vector<8x32xf32> to vector<8x32xbf16>
    %c0_13 = arith.constant 0 : index
    %c0_14 = arith.constant 0 : index
    %c0_15 = arith.constant 0 : index
    %28 = vector.load %arg8[%c0_13, %c0_14, %c0_15] : memref<1x8x32xbf16, #tpu.memory_space<vmem>>, vector<1x8x32xbf16>
    %29 = vector.shape_cast %28 : vector<1x8x32xbf16> to vector<8x32xbf16>
    %30 = vector.shape_cast %27 : vector<8x32xbf16> to vector<1x8x32xbf16>
    tpu.vector_store %arg8[%c0_13, %c0_14, %c0_15], %30 {strides = array<i32>} : memref<1x8x32xbf16, #tpu.memory_space<vmem>>, vector<1x8x32xbf16>,
    %c0_16 = arith.constant 0 : index
    %c0_17 = arith.constant 0 : index
    %31 = vector.load %arg6[%c0_16, %c0_17] : memref<32x32xbf16, #tpu.memory_space<vmem>>, vector<32x32xbf16>
    %cst_18 = arith.constant dense<0.000000e+00> : vector<8x32xf32>
    %32 = tpu.matmul %24, %31, %cst_18 {dimension_numbers = #tpu.dot_dimension_numbers<[1], [0], [0], [1], [0, 0, 1, 1], [], []>} : vector<8x32xbf16>, vector<32x32xbf16>, vector<8x32xf32> -> vector<8x32xf32>
    %33 = arith.truncf %32 : vector<8x32xf32> to vector<8x32xbf16>
    %c0_19 = arith.constant 0 : index
    %c0_20 = arith.constant 0 : index
    %c0_21 = arith.constant 0 : index
    %34 = vector.load %arg9[%c0_19, %c0_20, %c0_21] : memref<1x8x32xbf16, #tpu.memory_space<vmem>>, vector<1x8x32xbf16>
    %35 = vector.shape_cast %34 : vector<1x8x32xbf16> to vector<8x32xbf16>
    %36 = vector.shape_cast %33 : vector<8x32xbf16> to vector<1x8x32xbf16>
    tpu.vector_store %arg9[%c0_19, %c0_20, %c0_21], %36 {strides = array<i32>} : memref<1x8x32xbf16, #tpu.memory_space<vmem>>, vector<1x8x32xbf16>,
    %c0_22 = arith.constant 0 : index
    %c0_23 = arith.constant 0 : index
    %37 = vector.load %arg7[%c0_22, %c0_23] : memref<32x32xbf16, #tpu.memory_space<vmem>>, vector<32x32xbf16>
    %cst_24 = arith.constant dense<0.000000e+00> : vector<8x32xf32>
    %38 = tpu.matmul %24, %37, %cst_24 {dimension_numbers = #tpu.dot_dimension_numbers<[1], [0], [0], [1], [0, 0, 1, 1], [], []>} : vector<8x32xbf16>, vector<32x32xbf16>, vector<8x32xf32> -> vector<8x32xf32>
    %39 = arith.truncf %38 : vector<8x32xf32> to vector<8x32xbf16>
    %c0_25 = arith.constant 0 : index
    %c0_26 = arith.constant 0 : index
    %c0_27 = arith.constant 0 : index
    %40 = vector.load %arg10[%c0_25, %c0_26, %c0_27] : memref<1x8x32xbf16, #tpu.memory_space<vmem>>, vector<1x8x32xbf16>
    %41 = vector.shape_cast %40 : vector<1x8x32xbf16> to vector<8x32xbf16>
    %42 = vector.shape_cast %39 : vector<8x32xbf16> to vector<1x8x32xbf16>
    tpu.vector_store %arg10[%c0_25, %c0_26, %c0_27], %42 {strides = array<i32>} : memref<1x8x32xbf16, #tpu.memory_space<vmem>>, vector<1x8x32xbf16>,
    return
  }
  func.func @transform_0(%arg0: i32, %arg1: i32) -> (i32, i32, i32) {
    %c0_i32 = arith.constant 0 : i32
    %c0_i32_0 = arith.constant 0 : i32
    return %arg0, %arg1, %c0_i32 : i32, i32, i32
  }
  func.func @transform_1(%arg0: i32, %arg1: i32) -> (i32, i32) {
    %c0_i32 = arith.constant 0 : i32
    %c0_i32_0 = arith.constant 0 : i32
    %c0_i32_1 = arith.constant 0 : i32
    return %c0_i32, %c0_i32_0 : i32, i32
  }
  func.func @transform_2(%arg0: i32, %arg1: i32) -> (i32, i32) {
    %c0_i32 = arith.constant 0 : i32
    %c0_i32_0 = arith.constant 0 : i32
    %c0_i32_1 = arith.constant 0 : i32
    return %c0_i32, %c0_i32_0 : i32, i32
  }
  func.func @transform_3(%arg0: i32, %arg1: i32) -> (i32, i32) {
    %c0_i32 = arith.constant 0 : i32
    %c0_i32_0 = arith.constant 0 : i32
    %c0_i32_1 = arith.constant 0 : i32
    return %c0_i32, %c0_i32_0 : i32, i32
  }
  func.func @transform_4(%arg0: i32, %arg1: i32) -> (i32, i32) {
    %c0_i32 = arith.constant 0 : i32
    %c0_i32_0 = arith.constant 0 : i32
    %c0_i32_1 = arith.constant 0 : i32
    return %c0_i32, %c0_i32_0 : i32, i32
  }
  func.func @transform_5(%arg0: i32, %arg1: i32) -> (i32, i32) {
    %c0_i32 = arith.constant 0 : i32
    %c0_i32_0 = arith.constant 0 : i32
    %c0_i32_1 = arith.constant 0 : i32
    return %c0_i32, %c0_i32_0 : i32, i32
  }
  func.func @transform_6(%arg0: i32, %arg1: i32) -> (i32, i32, i32) {
    %c0_i32 = arith.constant 0 : i32
    %c0_i32_0 = arith.constant 0 : i32
    return %arg0, %arg1, %c0_i32 : i32, i32, i32
  }
  func.func @transform_7(%arg0: i32, %arg1: i32) -> (i32, i32, i32) {
    %c0_i32 = arith.constant 0 : i32
    %c0_i32_0 = arith.constant 0 : i32
    return %arg0, %arg1, %c0_i32 : i32, i32, i32
  }
  func.func @transform_8(%arg0: i32, %arg1: i32) -> (i32, i32, i32) {
    %c0_i32 = arith.constant 0 : i32
    %c0_i32_0 = arith.constant 0 : i32
    return %arg0, %arg1, %c0_i32 : i32, i32, i32
  }
}

</mosaic_0001>

<llo_original>
// kernel: tpu_custom_call.1
$region0: #{tpu_custom_call.1}
  #allocation0 [shape = 'u32[]', space=smem, size = 0x4, offset = 0x4, fixed_abs, tag = 'smem constant byte address 0x4 - core index']
  #allocation1 [shape = 'u32[144,128]{1,0:T(1,128)}', space=vmem, size = 0x12000, scoped, tag = 'internal scratch']
  %s0 = inlined_call_operand.hbm [shape: f32[2,8,32], index: 0, kind: input, shape index: {}]
  %s1 = inlined_call_operand.vmem [shape: f32[1,32], index: 1, kind: input, shape index: {}]
  %s2 = inlined_call_operand.vmem [shape: f32[1,32], index: 2, kind: input, shape index: {}]
  %s3 = inlined_call_operand.hbm [shape: bf16[32,32], index: 3, kind: input, shape index: {}]
  %s4 = inlined_call_operand.hbm [shape: bf16[32,32], index: 4, kind: input, shape index: {}]
  %s5 = inlined_call_operand.hbm [shape: bf16[32,32], index: 5, kind: input, shape index: {}]
  %s6 = inlined_call_operand.hbm [shape: bf16[2,8,32], index: 6, kind: output, shape index: {0}]
  %s7 = inlined_call_operand.hbm [shape: bf16[2,8,32], index: 7, kind: output, shape index: {1}]
  %s8 = inlined_call_operand.hbm [shape: bf16[2,8,32], index: 8, kind: output, shape index: {2}]
  %9 = xla_tuple %s6, %s7, %s8
  %s10 = sld [smem:[#allocation0]]
  $region89: #{tpu_custom_call.1} parent=0
    _
  %s12 = ssub.s32 1, %s10
  %s13 = scalar_select 0, %s12, %s10
  $region1: #{tpu_custom_call.1} parent=0
    #allocation2 [shape = 'u8[8192]{0}', space=vmem, size = 0x2000, scoped, tag = 'input window, operand 0']
    #allocation3 [shape = 's32[2]{0}', space=sflag, size = 0x8, scoped, tag = 'scoped memory for tpu_custom_call.1']
    #allocation4 [shape = 's32[2]{0}', space=sflag, size = 0x8, scoped, tag = 'scoped memory for tpu_custom_call.1']
    #allocation5 [shape = 'u8[8192]{0}', space=vmem, size = 0x2000, scoped, tag = 'input window, operand 3, single buffered']
    #allocation6 [shape = 's32[1]{0}', space=sflag, size = 0x4, scoped, tag = 'scoped memory for tpu_custom_call.1']
    #allocation7 [shape = 'u8[8192]{0}', space=vmem, size = 0x2000, scoped, tag = 'input window, operand 4, single buffered']
    #allocation8 [shape = 'u8[8192]{0}', space=vmem, size = 0x2000, scoped, tag = 'input window, operand 5, single buffered']
    #allocation9 [shape = 's32[1]{0}', space=sflag, size = 0x4, scoped, tag = 'scoped memory for tpu_custom_call.1']
    #allocation10 [shape = 'u8[4096]{0}', space=vmem, size = 0x1000, scoped, tag = 'output window, operand 0']
    #allocation11 [shape = 'u8[4096]{0}', space=vmem, size = 0x1000, scoped, tag = 'output window, operand 1']
    #allocation12 [shape = 's32[2]{0}', space=sflag, size = 0x8, scoped, tag = 'scoped memory for tpu_custom_call.1']
    #allocation13 [shape = 'u8[4096]{0}', space=vmem, size = 0x1000, scoped, tag = 'output window, operand 2']
    %14 = vsyncpa [#allocation3], 0
    %s15 = scalar_lea.sflag [#allocation3], 1
    %16 = vsyncpa %s15, 0
    %17 = vsyncpa [#allocation6], 0
    %18 = vsyncpa [#allocation9], 0
    %19 = vsyncpa [#allocation4], 0
    %s20 = scalar_lea.sflag [#allocation4], 1
    %21 = vsyncpa %s20, 0
    %22 = vsyncpa [#allocation12], 0
    %s23 = scalar_lea.sflag [#allocation12], 1
    %24 = vsyncpa %s23, 0
    loop: start=0, step=1, limit=4
    $region2: #{tpu_custom_call.1} parent=1 // loop_pre_header
      _
    $region3: #{tpu_custom_call.1} parent=1 // loop_header
      %s26 = sphi 0, %s30
      %p27 = scmp.ge.s32.totalorder %s26, 4
      %s33 = sphi 0, %s45
      %s34 = sphi 0, %s41
      %s35 = sphi 0, %s33
      %s36 = sphi 0, %s34
      %s37 = sphi 0, %s35
      %s38 = sphi 0, %s36
      %s50 = sphi 0, %s52
      %s53 = sphi 0, %s50
      %s54 = sphi 0, %s53
      %s70 = sphi 0, %s54
      %s74 = sphi 0, %s74
      %s76 = sphi 0, %s74
      %s77 = sphi 0, %s76
      %s91 = sphi 0, %s77
      %s95 = sphi 0, %s95
      %s97 = sphi 0, %s95
      %s98 = sphi 0, %s97
      %s112 = sphi 0, %s98
      %s116 = sphi 0, %s116
      %s118 = sphi 0, %s116
      %s119 = sphi 0, %s118
      %s133 = sphi 0, %s119
      %s137 = sphi 0, %s137
      %s139 = sphi 0, %s137
      %s140 = sphi 0, %s139
      %s154 = sphi 0, %s140
      %s158 = sphi 0, %s158
      %s160 = sphi 0, %s158
      %s161 = sphi 0, %s160
      %s175 = sphi 0, %s161
      %s183 = sphi 0, %s185
      %s186 = sphi 0, %s183
      %s187 = sphi 0, %s186
      %s203 = sphi 0, %s187
      %s211 = sphi 0, %s213
      %s214 = sphi 0, %s211
      %s215 = sphi 0, %s214
      %s231 = sphi 0, %s215
      %s239 = sphi 0, %s241
      %s242 = sphi 0, %s239
      %s243 = sphi 0, %s242
      %s259 = sphi 0, %s243
    $region4: #{tpu_custom_call.1} parent=1 // loop_header_branch
      %29 = sbr.rel (%p27) target = $region8
    $region5: #{tpu_custom_call.1} parent=1 // loop_body
      %s31 = ssub.s32 %s26, 1
      %s32 = ssub.s32 %s26, 2
      %s39 = sadd.s32 1, %s34
      %p40 = scmp.ge.s32.totalorder %s39, 1
      %s41 = scalar_select %p40, 0, %s39
      %s42 = sadd.s32 1, %s33
      %s43 = scalar_select %p40, %s42, %s33
      %p44 = scmp.ge.s32.totalorder %s43, 2
      %s45 = scalar_select %p44, 0, %s43
      %s46 = ssub.s32 %s33, %s45
      %s47 = ssub.s32 %s34, %s41
      %s48 = sor.u32 %s46, %s47
      %p49 = scmp.eq.s32.totalorder %s48, 0
      %s51 = sadd.s32 %s50, 1
      %s52 = scalar_select %p49, %s50, %s51
      %p55 = pneg %p49
      %p56 = scmp.eq.s32.totalorder %s26, 1
      %p57 = por %p55, %p56
      %p58 = scmp.ne.s32.totalorder %s50, %s53
      %p59 = scmp.eq.s32.totalorder %s26, 0
      %p60 = por %p58, %p59
      %p61 = scmp.ne.s32.totalorder %s50, %s53
      %p62 = scmp.eq.s32.totalorder %s31, 1
      %p63 = por %p61, %p62
      %p64 = scmp.ne.s32.totalorder %s53, %s54
      %p65 = scmp.eq.s32.totalorder %s31, 0
      %p66 = por %p64, %p65
      %p67 = scmp.ne.s32.totalorder %s53, %s54
      %p68 = scmp.eq.s32.totalorder %s32, 1
      %p69 = por %p67, %p68
      %p71 = scmp.ne.s32.totalorder %s54, %s70
      %p72 = scmp.eq.s32.totalorder %s32, 0
      %p73 = por %p71, %p72
      %s75 = sadd.s32 %s74, 1
      %p78 = scmp.eq.s32.totalorder %s26, 1
      %p79 = scmp.ne.s32.totalorder %s74, %s76
      %p80 = scmp.eq.s32.totalorder %s26, 0
      %p81 = por %p79, %p80
      %p82 = scmp.ne.s32.totalorder %s74, %s76
      %p83 = scmp.eq.s32.totalorder %s31, 1
      %p84 = por %p82, %p83
      %p85 = scmp.ne.s32.totalorder %s76, %s77
      %p86 = scmp.eq.s32.totalorder %s31, 0
      %p87 = por %p85, %p86
      %p88 = scmp.ne.s32.totalorder %s76, %s77
      %p89 = scmp.eq.s32.totalorder %s32, 1
      %p90 = por %p88, %p89
      %p92 = scmp.ne.s32.totalorder %s77, %s91
      %p93 = scmp.eq.s32.totalorder %s32, 0
      %p94 = por %p92, %p93
      %s96 = sadd.s32 %s95, 1
      %p99 = scmp.eq.s32.totalorder %s26, 1
      %p100 = scmp.ne.s32.totalorder %s95, %s97
      %p101 = scmp.eq.s32.totalorder %s26, 0
      %p102 = por %p100, %p101
      %p103 = scmp.ne.s32.totalorder %s95, %s97
      %p104 = scmp.eq.s32.totalorder %s31, 1
      %p105 = por %p103, %p104
      %p106 = scmp.ne.s32.totalorder %s97, %s98
      %p107 = scmp.eq.s32.totalorder %s31, 0
      %p108 = por %p106, %p107
      %p109 = scmp.ne.s32.totalorder %s97, %s98
      %p110 = scmp.eq.s32.totalorder %s32, 1
      %p111 = por %p109, %p110
      %p113 = scmp.ne.s32.totalorder %s98, %s112
      %p114 = scmp.eq.s32.totalorder %s32, 0
      %p115 = por %p113, %p114
      %s117 = sadd.s32 %s116, 1
      %p120 = scmp.eq.s32.totalorder %s26, 1
      %p121 = scmp.ne.s32.totalorder %s116, %s118
      %p122 = scmp.eq.s32.totalorder %s26, 0
      %p123 = por %p121, %p122
      %p124 = scmp.ne.s32.totalorder %s116, %s118
      %p125 = scmp.eq.s32.totalorder %s31, 1
      %p126 = por %p124, %p125
      %p127 = scmp.ne.s32.totalorder %s118, %s119
      %p128 = scmp.eq.s32.totalorder %s31, 0
      %p129 = por %p127, %p128
      %p130 = scmp.ne.s32.totalorder %s118, %s119
      %p131 = scmp.eq.s32.totalorder %s32, 1
      %p132 = por %p130, %p131
      %p134 = scmp.ne.s32.totalorder %s119, %s133
      %p135 = scmp.eq.s32.totalorder %s32, 0
      %p136 = por %p134, %p135
      %s138 = sadd.s32 %s137, 1
      %p141 = scmp.eq.s32.totalorder %s26, 1
      %p142 = scmp.ne.s32.totalorder %s137, %s139
      %p143 = scmp.eq.s32.totalorder %s26, 0
      %p144 = por %p142, %p143
      %p145 = scmp.ne.s32.totalorder %s137, %s139
      %p146 = scmp.eq.s32.totalorder %s31, 1
      %p147 = por %p145, %p146
      %p148 = scmp.ne.s32.totalorder %s139, %s140
      %p149 = scmp.eq.s32.totalorder %s31, 0
      %p150 = por %p148, %p149
      %p151 = scmp.ne.s32.totalorder %s139, %s140
      %p152 = scmp.eq.s32.totalorder %s32, 1
      %p153 = por %p151, %p152
      %p155 = scmp.ne.s32.totalorder %s140, %s154
      %p156 = scmp.eq.s32.totalorder %s32, 0
      %p157 = por %p155, %p156
      %s159 = sadd.s32 %s158, 1
      %p162 = scmp.eq.s32.totalorder %s26, 1
      %p163 = scmp.ne.s32.totalorder %s158, %s160
      %p164 = scmp.eq.s32.totalorder %s26, 0
      %p165 = por %p163, %p164
      %p166 = scmp.ne.s32.totalorder %s158, %s160
      %p167 = scmp.eq.s32.totalorder %s31, 1
      %p168 = por %p166, %p167
      %p169 = scmp.ne.s32.totalorder %s160, %s161
      %p170 = scmp.eq.s32.totalorder %s31, 0
      %p171 = por %p169, %p170
      %p172 = scmp.ne.s32.totalorder %s160, %s161
      %p173 = scmp.eq.s32.totalorder %s32, 1
      %p174 = por %p172, %p173
      %p176 = scmp.ne.s32.totalorder %s161, %s175
      %p177 = scmp.eq.s32.totalorder %s32, 0
      %p178 = por %p176, %p177
      %s179 = ssub.s32 %s33, %s45
      %s180 = ssub.s32 %s34, %s41
      %s181 = sor.u32 %s179, %s180
      %p182 = scmp.eq.s32.totalorder %s181, 0
      %s184 = sadd.s32 %s183, 1
      %s185 = scalar_select %p182, %s183, %s184
      %p188 = pneg %p182
      %p189 = scmp.eq.s32.totalorder %s26, 1
      %p190 = por %p188, %p189
      %p191 = scmp.ne.s32.totalorder %s183, %s186
      %p192 = scmp.eq.s32.totalorder %s26, 0
      %p193 = por %p191, %p192
      %p194 = scmp.ne.s32.totalorder %s183, %s186
      %p195 = scmp.eq.s32.totalorder %s31, 1
      %p196 = por %p194, %p195
      %p197 = scmp.ne.s32.totalorder %s186, %s187
      %p198 = scmp.eq.s32.totalorder %s31, 0
      %p199 = por %p197, %p198
      %p200 = scmp.ne.s32.totalorder %s186, %s187
      %p201 = scmp.eq.s32.totalorder %s32, 1
      %p202 = por %p200, %p201
      %p204 = scmp.ne.s32.totalorder %s187, %s203
      %p205 = scmp.eq.s32.totalorder %s32, 0
      %p206 = por %p204, %p205
      %s207 = ssub.s32 %s33, %s45
      %s208 = ssub.s32 %s34, %s41
      %s209 = sor.u32 %s207, %s208
      %p210 = scmp.eq.s32.totalorder %s209, 0
      %s212 = sadd.s32 %s211, 1
      %s213 = scalar_select %p210, %s211, %s212
      %p216 = pneg %p210
      %p217 = scmp.eq.s32.totalorder %s26, 1
      %p218 = por %p216, %p217
      %p219 = scmp.ne.s32.totalorder %s211, %s214
      %p220 = scmp.eq.s32.totalorder %s26, 0
      %p221 = por %p219, %p220
      %p222 = scmp.ne.s32.totalorder %s211, %s214
      %p223 = scmp.eq.s32.totalorder %s31, 1
      %p224 = por %p222, %p223
      %p225 = scmp.ne.s32.totalorder %s214, %s215
      %p226 = scmp.eq.s32.totalorder %s31, 0
      %p227 = por %p225, %p226
      %p228 = scmp.ne.s32.totalorder %s214, %s215
      %p229 = scmp.eq.s32.totalorder %s32, 1
      %p230 = por %p228, %p229
      %p232 = scmp.ne.s32.totalorder %s215, %s231
      %p233 = scmp.eq.s32.totalorder %s32, 0
      %p234 = por %p232, %p233
      %s235 = ssub.s32 %s33, %s45
      %s236 = ssub.s32 %s34, %s41
      %s237 = sor.u32 %s235, %s236
      %p238 = scmp.eq.s32.totalorder %s237, 0
      %s240 = sadd.s32 %s239, 1
      %s241 = scalar_select %p238, %s239, %s240
      %p244 = pneg %p238
      %p245 = scmp.eq.s32.totalorder %s26, 1
      %p246 = por %p244, %p245
      %p247 = scmp.ne.s32.totalorder %s239, %s242
      %p248 = scmp.eq.s32.totalorder %s26, 0
      %p249 = por %p247, %p248
      %p250 = scmp.ne.s32.totalorder %s239, %s242
      %p251 = scmp.eq.s32.totalorder %s31, 1
      %p252 = por %p250, %p251
      %p253 = scmp.ne.s32.totalorder %s242, %s243
      %p254 = scmp.eq.s32.totalorder %s31, 0
      %p255 = por %p253, %p254
      %p256 = scmp.ne.s32.totalorder %s242, %s243
      %p257 = scmp.eq.s32.totalorder %s32, 1
      %p258 = por %p256, %p257
      %p260 = scmp.ne.s32.totalorder %s243, %s259
      %p261 = scmp.eq.s32.totalorder %s32, 0
      %p262 = por %p260, %p261
      %p263 = scmp.le.s32.totalorder 1, %s26
      %p264 = scmp.lt.s32.totalorder %s26, 3
      %p265 = pnand %p263, %p264
      %p266 = pneg %p265
      // Predicated region
      $region9: #{tpu_custom_call.1} parent=5 // pred_check
        _
      $region10: #{tpu_custom_call.1} parent=5 // pred_check_branch
        %268 = sbr.rel (%p265) target = $region12
      $region11: #{tpu_custom_call.1} parent=5 // pred_region
        %s269 = ssub.s32 %s26, 1
        // Predicated region
        $region13: #{tpu_custom_call.1} parent=11 // pred_check
          %p270 = pneg %p87
        $region14: #{tpu_custom_call.1} parent=11 // pred_check_branch
          %272 = sbr.rel (%p270) target = $region16
        $region15: #{tpu_custom_call.1} parent=11 // pred_region
          _
        $region16: #{tpu_custom_call.1} parent=11 // pred_fallthru
          _
        // Predicated region
        $region17: #{tpu_custom_call.1} parent=11 // pred_check
          %p273 = pneg %p108
        $region18: #{tpu_custom_call.1} parent=11 // pred_check_branch
          %275 = sbr.rel (%p273) target = $region20
        $region19: #{tpu_custom_call.1} parent=11 // pred_region
          _
        $region20: #{tpu_custom_call.1} parent=11 // pred_fallthru
          _
        // Predicated region
        $region21: #{tpu_custom_call.1} parent=11 // pred_check
          %p276 = pneg %p129
        $region22: #{tpu_custom_call.1} parent=11 // pred_check_branch
          %278 = sbr.rel (%p276) target = $region24
        $region23: #{tpu_custom_call.1} parent=11 // pred_region
          %s280 = ssub.s32 256, 256
          %281 = vsyncadd [#allocation6], %s280
          %s282 = sshll.u32 [#allocation5], 4
          %s283 = int_to_ptr.vmem [resolvable:$true] %s282
          %288 = dma.hbm_to_vmem [thread:$0]  %s3, 256, %s283, [#allocation6], 64, 64, 4
        $region24: #{tpu_custom_call.1} parent=11 // pred_fallthru
          _
        // Predicated region
        $region25: #{tpu_custom_call.1} parent=11 // pred_check
          %p289 = pneg %p150
        $region26: #{tpu_custom_call.1} parent=11 // pred_check_branch
          %291 = sbr.rel (%p289) target = $region28
        $region27: #{tpu_custom_call.1} parent=11 // pred_region
          %s293 = ssub.s32 256, 256
          %294 = vsyncadd [#allocation6], %s293
          %s295 = sshll.u32 [#allocation7], 4
          %s296 = int_to_ptr.vmem [resolvable:$true] %s295
          %301 = dma.hbm_to_vmem [thread:$0]  %s4, 256, %s296, [#allocation6], 64, 64, 4
        $region28: #{tpu_custom_call.1} parent=11 // pred_fallthru
          _
        // Predicated region
        $region29: #{tpu_custom_call.1} parent=11 // pred_check
          %p302 = pneg %p171
        $region30: #{tpu_custom_call.1} parent=11 // pred_check_branch
          %304 = sbr.rel (%p302) target = $region32
        $region31: #{tpu_custom_call.1} parent=11 // pred_region
          %s306 = ssub.s32 256, 256
          %307 = vsyncadd [#allocation9], %s306
          %s308 = sshll.u32 [#allocation8], 4
          %s309 = int_to_ptr.vmem [resolvable:$true] %s308
          %314 = dma.hbm_to_vmem [thread:$0]  %s5, 256, %s309, [#allocation9], 64, 64, 4
        $region32: #{tpu_custom_call.1} parent=11 // pred_fallthru
          _
      $region12: #{tpu_custom_call.1} parent=5 // pred_fallthru
        _
      %p315 = scmp.lt.s32.totalorder %s26, 2
      // Predicated region
      $region33: #{tpu_custom_call.1} parent=5 // pred_check
        %p316 = pneg %p315
      $region34: #{tpu_custom_call.1} parent=5 // pred_check_branch
        %318 = sbr.rel (%p316) target = $region36
      $region35: #{tpu_custom_call.1} parent=5 // pred_region
        // Predicated region
        $region37: #{tpu_custom_call.1} parent=35 // pred_check
          %p319 = pneg %p60
        $region38: #{tpu_custom_call.1} parent=35 // pred_check_branch
          %321 = sbr.rel (%p319) target = $region40
        $region39: #{tpu_custom_call.1} parent=35 // pred_region
          %s322 = sand.u32 %s50, 1
          %s323 = scalar_lea.sflag [#allocation3], %s322
          %s324 = sand.u32 %s50, 1
          %s325 = smul.addr %s324, 8
          %s326 = scalar_lea.vmem [#allocation2], %s325
          %s328 = ssub.s32 128, 128
          %329 = vsyncadd %s323, %s328
          %s330 = sadd.s32 %s34, %s33
          %s331 = smul.addr %s330, 128
          %s332 = scalar_lea.hbm %s0, %s331
          %s334 = sshll.u32 %s326, 4
          %s335 = int_to_ptr.vmem [resolvable:$true] %s334
          %337 = dma.hbm_to_vmem [thread:$0]  %s332, 128, %s335, %s323
        $region40: #{tpu_custom_call.1} parent=35 // pred_fallthru
          _
      $region36: #{tpu_custom_call.1} parent=5 // pred_fallthru
        _
      %p338 = scmp.le.s32.totalorder 1, %s26
      %p339 = scmp.lt.s32.totalorder %s26, 3
      %p340 = pnand %p338, %p339
      %p341 = pneg %p340
      // Predicated region
      $region41: #{tpu_custom_call.1} parent=5 // pred_check
        _
      $region42: #{tpu_custom_call.1} parent=5 // pred_check_branch
        %343 = sbr.rel (%p340) target = $region44
      $region43: #{tpu_custom_call.1} parent=5 // pred_region
        %s344 = ssub.s32 %s26, 1
        %s345 = sand.u32 %s53, 1
        %s346 = scalar_lea.sflag [#allocation3], %s345
        %s347 = sand.u32 %s53, 1
        %s348 = smul.addr %s347, 8
        %s349 = scalar_lea.vmem [#allocation2], %s348
        // Predicated region
        $region45: #{tpu_custom_call.1} parent=43 // pred_check
          %p350 = pneg %p66
        $region46: #{tpu_custom_call.1} parent=43 // pred_check_branch
          %352 = sbr.rel (%p350) target = $region48
        $region47: #{tpu_custom_call.1} parent=43 // pred_region
          %353 = dma.done %s346, 128
        $region48: #{tpu_custom_call.1} parent=43 // pred_fallthru
          _
        // Predicated region
        $region49: #{tpu_custom_call.1} parent=43 // pred_check
          %p354 = pneg %p129
        $region50: #{tpu_custom_call.1} parent=43 // pred_check_branch
          %356 = sbr.rel (%p354) target = $region52
        $region51: #{tpu_custom_call.1} parent=43 // pred_region
          %357 = dma.done [#allocation6], 256
        $region52: #{tpu_custom_call.1} parent=43 // pred_fallthru
          _
        // Predicated region
        $region53: #{tpu_custom_call.1} parent=43 // pred_check
          %p358 = pneg %p150
        $region54: #{tpu_custom_call.1} parent=43 // pred_check_branch
          %360 = sbr.rel (%p358) target = $region56
        $region55: #{tpu_custom_call.1} parent=43 // pred_region
          %361 = dma.done [#allocation6], 256
        $region56: #{tpu_custom_call.1} parent=43 // pred_fallthru
          _
        // Predicated region
        $region57: #{tpu_custom_call.1} parent=43 // pred_check
          %p362 = pneg %p171
        $region58: #{tpu_custom_call.1} parent=43 // pred_check_branch
          %364 = sbr.rel (%p362) target = $region60
        $region59: #{tpu_custom_call.1} parent=43 // pred_region
          %365 = dma.done [#allocation9], 256
        $region60: #{tpu_custom_call.1} parent=43 // pred_fallthru
          _
        %s366 = sand.u32 %s53, 1
        %s367 = scalar_lea.sflag [#allocation3], %s366
        %s368 = sand.u32 %s53, 1
        %s369 = smul.addr %s368, 8
        %s370 = scalar_lea.vmem [#allocation2], %s369
        %p371 = pneg %p66
        %p372 = pneg %p63
        %p373 = pneg %p87
        %p374 = pneg %p84
        %p375 = pneg %p108
        %p376 = pneg %p105
        %p377 = pneg %p129
        %p378 = pneg %p126
        %p379 = pneg %p150
        %p380 = pneg %p147
        %p381 = pneg %p171
        %p382 = pneg %p168
        %p383 = pneg %p199
        %p384 = pneg %p196
        %s385 = sand.u32 %s186, 1
        %s386 = scalar_lea.sflag [#allocation4], %s385
        %s387 = sand.u32 %s186, 1
        %s388 = smul.addr %s387, 4
        %s389 = scalar_lea.vmem [#allocation10], %s388
        %p390 = pneg %p227
        %p391 = pneg %p224
        %s392 = sand.u32 %s31, 1
        %s393 = scalar_lea.sflag [#allocation12], %s392
        %s394 = sand.u32 %s214, 1
        %s395 = smul.addr %s394, 4
        %s396 = scalar_lea.vmem [#allocation11], %s395
        %p397 = pneg %p255
        %p398 = pneg %p252
        %s399 = sand.u32 %s31, 1
        %s400 = scalar_lea.sflag [#allocation12], %s399
        %s401 = sand.u32 %s242, 1
        %s402 = smul.addr %s401, 4
        %s403 = scalar_lea.vmem [#allocation13], %s402
        %v405 = vld [vmem:[%s349] sm:$0xff]
        %v406 = vld [vmem:[%s1] sm:$0x1]
        %v407 = vld [vmem:[%s2] sm:$0x1]
        %vm408 = vcmask 261120
        %v409 = vsel %vm408, %v405, 0.0
        %410 = vadd.xlane.f32.xlu0 %v409
        %v411 = vpop.xlane.xlu0 %410
        %v412 = vrcp.pop 32.0
        %v413 = vmul.f32 %v411, %v412
        %v414 = vsub.f32 %v405, %v413
        %v415 = vmul.f32 %v414, %v414
        %v416 = vsel %vm408, %v415, 0.0
        %417 = vadd.xlane.f32.xlu0 %v416
        %v418 = vpop.xlane.xlu0 %417
        %v419 = vmul.f32 %v418, %v412
        %v420 = vadd.f32 %v419, 1e-05
        %v421 = vrsqrt.pop %v420
        %v422 = vmul.f32 %v414, %v421
        %v424 = vlaneseq
        %v425 = vshrl.u32 %v424, 7
        %v426 = vsub.s32 0, %v425
        %v427 = vrot.slane %v406, %v426
        %v429 = vmul.f32 %v422, %v427
        %v431 = vlaneseq
        %v432 = vshrl.u32 %v431, 7
        %v433 = vsub.s32 0, %v432
        %v434 = vrot.slane %v407, %v433
        %v436 = vadd.f32 %v429, %v434
        %v437 = vpack.c.bf16 %v436, %v436
        %v438 = vld [vmem:[#allocation5] sm:$0xf]
        %v439 = vld [vmem:[#allocation5 + $0x4] sm:$0xf]
        %v440 = vld [vmem:[#allocation5 + $0x8] sm:$0xf]
        %v441 = vld [vmem:[#allocation5 + $0xc] sm:$0xf]
        %v446 = vunpack.c.l.b16 %v438
        %v447 = vunpack.c.l.b16 %v439
        %v448 = vunpack.c.l.b16 %v440
        %v449 = vunpack.c.l.b16 %v441
        %v450 = vpack.c.b16 %v447, %v446
        %v451 = vpack.c.b16 %v449, %v448
        %v455 = vsel %vm408, %v437, 0
        %457 = vmatprep.subr.bf16.mxu0 0
        %458 = vmatpush1.bf16.msra.mxu0 0
        %459 = vmatprep.subr.bf16.mxu0 0
        %460 = vmatpush1.bf16.msra.mxu0 0
        %461 = vmatprep.subr.bf16.mxu0 0
        %462 = vmatpush1.bf16.msra.mxu0 0
        %463 = vmatprep.subr.bf16.mxu0 0
        %464 = vmatpush1.bf16.msra.mxu0 0
        %465 = vmatprep.subr.bf16.mxu0 0
        %466 = vmatpush1.bf16.msra.mxu0 0
        %467 = vmatprep.subr.bf16.mxu0 0
        %468 = vmatpush1.bf16.msra.mxu0 0
        %469 = vmatprep.subr.bf16.mxu0 0
        %470 = vmatpush1.bf16.msra.mxu0 %v451
        %471 = vmatprep.subr.bf16.mxu0 0
        %472 = vmatpush1.bf16.msra.mxu0 %v450
        %473 = vmatprep.subr.bf16.mxu0 0
        %474 = vmatpush2.bf16.msra.mxu0 0
        %475 = vmatprep.subr.bf16.mxu0 0
        %476 = vmatpush2.bf16.msra.mxu0 0
        %477 = vmatprep.subr.bf16.mxu0 0
        %478 = vmatpush2.bf16.msra.mxu0 0
        %479 = vmatprep.subr.bf16.mxu0 0
        %480 = vmatpush2.bf16.msra.mxu0 0
        %481 = vmatprep.subr.bf16.mxu0 0
        %482 = vmatpush2.bf16.msra.mxu0 0
        %483 = vmatprep.subr.bf16.mxu0 0
        %484 = vmatpush2.bf16.msra.mxu0 0
        %485 = vmatprep.subr.bf16.mxu0 0
        %486 = vmatpush2.bf16.msra.mxu0 0
        %487 = vmatprep.subr.bf16.mxu0 0
        %488 = vmatpush2.bf16.msra.mxu0 0
        %489 = vmatprep.mubr.bf16.mxu0 0
        %490 = vmatmul.mubr.bf16.gmra.mxu0 %v455
        %v491 = vpop.f32.mrf.mxu0
        %v492 = vadd.f32 0.0, %v491
        %v493 = vpop.f32.mrf.mxu0
        %v494 = vpop.f32.mrf.mxu0
        %v495 = vpop.f32.mrf.mxu0
        %496 = vdwg.mxu0
        %v497 = vpack.c.bf16 %v492, %v492
        %vm498 = vcmask 257024
        %499 = vst.msk [vmem:[%s389] sm:$0xf] %vm498, %v497
        %v500 = vld [vmem:[#allocation7] sm:$0xf]
        %v501 = vld [vmem:[#allocation7 + $0x4] sm:$0xf]
        %v502 = vld [vmem:[#allocation7 + $0x8] sm:$0xf]
        %v503 = vld [vmem:[#allocation7 + $0xc] sm:$0xf]
        %v508 = vunpack.c.l.b16 %v500
        %v509 = vunpack.c.l.b16 %v501
        %v510 = vunpack.c.l.b16 %v502
        %v511 = vunpack.c.l.b16 %v503
        %v512 = vpack.c.b16 %v509, %v508
        %v513 = vpack.c.b16 %v511, %v510
        %516 = vmatprep.subr.bf16.mxu0 0
        %517 = vmatpush1.bf16.msra.mxu0 0
        %518 = vmatprep.subr.bf16.mxu0 0
        %519 = vmatpush1.bf16.msra.mxu0 0
        %520 = vmatprep.subr.bf16.mxu0 0
        %521 = vmatpush1.bf16.msra.mxu0 0
        %522 = vmatprep.subr.bf16.mxu0 0
        %523 = vmatpush1.bf16.msra.mxu0 0
        %524 = vmatprep.subr.bf16.mxu0 0
        %525 = vmatpush1.bf16.msra.mxu0 0
        %526 = vmatprep.subr.bf16.mxu0 0
        %527 = vmatpush1.bf16.msra.mxu0 0
        %528 = vmatprep.subr.bf16.mxu0 0
        %529 = vmatpush1.bf16.msra.mxu0 %v513
        %530 = vmatprep.subr.bf16.mxu0 0
        %531 = vmatpush1.bf16.msra.mxu0 %v512
        %532 = vmatprep.subr.bf16.mxu0 0
        %533 = vmatpush2.bf16.msra.mxu0 0
        %534 = vmatprep.subr.bf16.mxu0 0
        %535 = vmatpush2.bf16.msra.mxu0 0
        %536 = vmatprep.subr.bf16.mxu0 0
        %537 = vmatpush2.bf16.msra.mxu0 0
        %538 = vmatprep.subr.bf16.mxu0 0
        %539 = vmatpush2.bf16.msra.mxu0 0
        %540 = vmatprep.subr.bf16.mxu0 0
        %541 = vmatpush2.bf16.msra.mxu0 0
        %542 = vmatprep.subr.bf16.mxu0 0
        %543 = vmatpush2.bf16.msra.mxu0 0
        %544 = vmatprep.subr.bf16.mxu0 0
        %545 = vmatpush2.bf16.msra.mxu0 0
        %546 = vmatprep.subr.bf16.mxu0 0
        %547 = vmatpush2.bf16.msra.mxu0 0
        %548 = vmatprep.mubr.bf16.mxu0 0
        %549 = vmatmul.mubr.bf16.gmra.mxu0 %v455
        %v550 = vpop.f32.mrf.mxu0
        %v551 = vadd.f32 0.0, %v550
        %v552 = vpop.f32.mrf.mxu0
        %v553 = vpop.f32.mrf.mxu0
        %v554 = vpop.f32.mrf.mxu0
        %555 = vdwg.mxu0
        %v556 = vpack.c.bf16 %v551, %v551
        %557 = vst.msk [vmem:[%s396] sm:$0xf] %vm498, %v556
        %v558 = vld [vmem:[#allocation8] sm:$0xf]
        %v559 = vld [vmem:[#allocation8 + $0x4] sm:$0xf]
        %v560 = vld [vmem:[#allocation8 + $0x8] sm:$0xf]
        %v561 = vld [vmem:[#allocation8 + $0xc] sm:$0xf]
        %v566 = vunpack.c.l.b16 %v558
        %v567 = vunpack.c.l.b16 %v559
        %v568 = vunpack.c.l.b16 %v560
        %v569 = vunpack.c.l.b16 %v561
        %v570 = vpack.c.b16 %v567, %v566
        %v571 = vpack.c.b16 %v569, %v568
        %574 = vmatprep.subr.bf16.mxu0 0
        %575 = vmatpush1.bf16.msra.mxu0 0
        %576 = vmatprep.subr.bf16.mxu0 0
        %577 = vmatpush1.bf16.msra.mxu0 0
        %578 = vmatprep.subr.bf16.mxu0 0
        %579 = vmatpush1.bf16.msra.mxu0 0
        %580 = vmatprep.subr.bf16.mxu0 0
        %581 = vmatpush1.bf16.msra.mxu0 0
        %582 = vmatprep.subr.bf16.mxu0 0
        %583 = vmatpush1.bf16.msra.mxu0 0
        %584 = vmatprep.subr.bf16.mxu0 0
        %585 = vmatpush1.bf16.msra.mxu0 0
        %586 = vmatprep.subr.bf16.mxu0 0
        %587 = vmatpush1.bf16.msra.mxu0 %v571
        %588 = vmatprep.subr.bf16.mxu0 0
        %589 = vmatpush1.bf16.msra.mxu0 %v570
        %590 = vmatprep.subr.bf16.mxu0 0
        %591 = vmatpush2.bf16.msra.mxu0 0
        %592 = vmatprep.subr.bf16.mxu0 0
        %593 = vmatpush2.bf16.msra.mxu0 0
        %594 = vmatprep.subr.bf16.mxu0 0
        %595 = vmatpush2.bf16.msra.mxu0 0
        %596 = vmatprep.subr.bf16.mxu0 0
        %597 = vmatpush2.bf16.msra.mxu0 0
        %598 = vmatprep.subr.bf16.mxu0 0
        %599 = vmatpush2.bf16.msra.mxu0 0
        %600 = vmatprep.subr.bf16.mxu0 0
        %601 = vmatpush2.bf16.msra.mxu0 0
        %602 = vmatprep.subr.bf16.mxu0 0
        %603 = vmatpush2.bf16.msra.mxu0 0
        %604 = vmatprep.subr.bf16.mxu0 0
        %605 = vmatpush2.bf16.msra.mxu0 0
        %606 = vmatprep.mubr.bf16.mxu0 0
        %607 = vmatmul.mubr.bf16.gmra.mxu0 %v455
        %v608 = vpop.f32.mrf.mxu0
        %v609 = vadd.f32 0.0, %v608
        %v610 = vpop.f32.mrf.mxu0
        %v611 = vpop.f32.mrf.mxu0
        %v612 = vpop.f32.mrf.mxu0
        %613 = vdwg.mxu0
        %v614 = vpack.c.bf16 %v609, %v609
        %615 = vst.msk [vmem:[%s403] sm:$0xf] %vm498, %v614
        %s616 = sand.u32 %s186, 1
        %s617 = scalar_lea.sflag [#allocation4], %s616
        %s618 = sand.u32 %s186, 1
        %s619 = smul.addr %s618, 4
        %s620 = scalar_lea.vmem [#allocation10], %s619
        %s621 = sand.u32 %s31, 1
        %s622 = scalar_lea.sflag [#allocation12], %s621
        %s623 = sand.u32 %s214, 1
        %s624 = smul.addr %s623, 4
        %s625 = scalar_lea.vmem [#allocation11], %s624
        %s626 = sand.u32 %s31, 1
        %s627 = scalar_lea.sflag [#allocation12], %s626
        %s628 = sand.u32 %s242, 1
        %s629 = smul.addr %s628, 4
        %s630 = scalar_lea.vmem [#allocation13], %s629
        // Predicated region
        $region61: #{tpu_custom_call.1} parent=43 // pred_check
          %p631 = pneg %p196
        $region62: #{tpu_custom_call.1} parent=43 // pred_check_branch
          %633 = sbr.rel (%p631) target = $region64
        $region63: #{tpu_custom_call.1} parent=43 // pred_region
          %s635 = ssub.s32 64, 64
          %636 = vsyncadd %s617, %s635
          %s637 = sadd.s32 %s36, %s35
          %s638 = smul.addr %s637, 64
          %s639 = scalar_lea.hbm %s6, %s638
          %s641 = sshll.u32 %s620, 4
          %s642 = int_to_ptr.vmem [resolvable:$true] %s641
          %644 = dma.vmem_to_hbm [thread:$0]  %s642, 64, %s639, %s617
        $region64: #{tpu_custom_call.1} parent=43 // pred_fallthru
          _
        // Predicated region
        $region65: #{tpu_custom_call.1} parent=43 // pred_check
          %p645 = pneg %p224
        $region66: #{tpu_custom_call.1} parent=43 // pred_check_branch
          %647 = sbr.rel (%p645) target = $region68
        $region67: #{tpu_custom_call.1} parent=43 // pred_region
          %s649 = ssub.s32 64, 64
          %650 = vsyncadd %s622, %s649
          %s651 = sadd.s32 %s36, %s35
          %s652 = smul.addr %s651, 64
          %s653 = scalar_lea.hbm %s7, %s652
          %s655 = sshll.u32 %s625, 4
          %s656 = int_to_ptr.vmem [resolvable:$true] %s655
          %658 = dma.vmem_to_hbm [thread:$0]  %s656, 64, %s653, %s622
        $region68: #{tpu_custom_call.1} parent=43 // pred_fallthru
          _
        // Predicated region
        $region69: #{tpu_custom_call.1} parent=43 // pred_check
          %p659 = pneg %p252
        $region70: #{tpu_custom_call.1} parent=43 // pred_check_branch
          %661 = sbr.rel (%p659) target = $region72
        $region71: #{tpu_custom_call.1} parent=43 // pred_region
          %s663 = ssub.s32 64, 64
          %664 = vsyncadd %s627, %s663
          %s665 = sadd.s32 %s36, %s35
          %s666 = smul.addr %s665, 64
          %s667 = scalar_lea.hbm %s8, %s666
          %s669 = sshll.u32 %s630, 4
          %s670 = int_to_ptr.vmem [resolvable:$true] %s669
          %672 = dma.vmem_to_hbm [thread:$0]  %s670, 64, %s667, %s627
        $region72: #{tpu_custom_call.1} parent=43 // pred_fallthru
          _
      $region44: #{tpu_custom_call.1} parent=5 // pred_fallthru
        _
      %p673 = scmp.le.s32.totalorder 2, %s26
      // Predicated region
      $region73: #{tpu_custom_call.1} parent=5 // pred_check
        %p674 = pneg %p673
      $region74: #{tpu_custom_call.1} parent=5 // pred_check_branch
        %676 = sbr.rel (%p674) target = $region76
      $region75: #{tpu_custom_call.1} parent=5 // pred_region
        %s677 = ssub.s32 %s26, 2
        // Predicated region
        $region77: #{tpu_custom_call.1} parent=75 // pred_check
          %p678 = pneg %p202
        $region78: #{tpu_custom_call.1} parent=75 // pred_check_branch
          %680 = sbr.rel (%p678) target = $region80
        $region79: #{tpu_custom_call.1} parent=75 // pred_region
          %s681 = sand.u32 %s187, 1
          %s682 = scalar_lea.sflag [#allocation4], %s681
          %s683 = sand.u32 %s187, 1
          %s684 = smul.addr %s683, 4
          %s685 = scalar_lea.vmem [#allocation10], %s684
          %686 = dma.done %s682, 64
        $region80: #{tpu_custom_call.1} parent=75 // pred_fallthru
          _
        // Predicated region
        $region81: #{tpu_custom_call.1} parent=75 // pred_check
          %p687 = pneg %p230
        $region82: #{tpu_custom_call.1} parent=75 // pred_check_branch
          %689 = sbr.rel (%p687) target = $region84
        $region83: #{tpu_custom_call.1} parent=75 // pred_region
          %s690 = sand.u32 %s32, 1
          %s691 = scalar_lea.sflag [#allocation12], %s690
          %s692 = sand.u32 %s215, 1
          %s693 = smul.addr %s692, 4
          %s694 = scalar_lea.vmem [#allocation11], %s693
          %695 = dma.done %s691, 64
        $region84: #{tpu_custom_call.1} parent=75 // pred_fallthru
          _
        // Predicated region
        $region85: #{tpu_custom_call.1} parent=75 // pred_check
          %p696 = pneg %p258
        $region86: #{tpu_custom_call.1} parent=75 // pred_check_branch
          %698 = sbr.rel (%p696) target = $region88
        $region87: #{tpu_custom_call.1} parent=75 // pred_region
          %s699 = sand.u32 %s32, 1
          %s700 = scalar_lea.sflag [#allocation12], %s699
          %s701 = sand.u32 %s243, 1
          %s702 = smul.addr %s701, 4
          %s703 = scalar_lea.vmem [#allocation13], %s702
          %704 = dma.done %s700, 64
        $region88: #{tpu_custom_call.1} parent=75 // pred_fallthru
          _
      $region76: #{tpu_custom_call.1} parent=5 // pred_fallthru
        _
    $region6: #{tpu_custom_call.1} parent=1 // loop_footer
      %s30 = sadd.s32 1, %s26
    $region7: #{tpu_custom_call.1} parent=1 // loop_footer_branch
      %25 = sbr.rel target = $region3
    $region8: #{tpu_custom_call.1} parent=1 // loop_exit
      _
    %705 = vsyncpa [#allocation3], 1
    %s706 = scalar_lea.sflag [#allocation3], 1
    %707 = vsyncpa %s706, 1
    %708 = vsyncpa [#allocation6], 1
    %709 = vsyncpa [#allocation9], 1
    %710 = vsyncpa [#allocation4], 1
    %s711 = scalar_lea.sflag [#allocation4], 1
    %712 = vsyncpa %s711, 1
    %713 = vsyncpa [#allocation12], 1
    %s714 = scalar_lea.sflag [#allocation12], 1
    %715 = vsyncpa %s714, 1

</llo_original>
